<compile_context>
chip_gen: v7x
topology: tpu7x:2x2x1
jax: 0.10.0
libtpu: 0.0.40
codegen_flags: <defaults>
</compile_context>

<pallas_src>
import jax
import jax.numpy as jnp
from jax import lax
from jax.experimental import pallas as pl
from jax.experimental.pallas import tpu as pltpu


def siamese_kernel(g_ref, h_ref, w1t_ref, b1_ref, w2t_ref, b2_ref, out_ref):
    """One grid step: embed one g tile and one h tile, write lane-dense distances.

    g_ref, h_ref : (tb, D)   input dtype (f32 or bf16); cast to weight dtype in-kernel
    w1t_ref      : (H, D)    compute dtype (w1 transposed)
    b1_ref       : (H, 1)    f32
    w2t_ref      : (E, H)    compute dtype (w2 transposed)
    b2_ref       : (E, 1)    f32
    out_ref      : (1, tb)   f32 -- lane-dense distances for this batch tile
    """

    def embed_t(x_tile):
        # (H, D) . (tb, D)^T -> (H, tb): the transpose folds into the dot dimension
        # numbers (contract lane axes of both operands), so batch lands on lanes and
        # no explicit relayout is emitted.
        x = x_tile.astype(w1t_ref.dtype)
        z = lax.dot_general(w1t_ref[...], x, (((1,), (1,)), ((), ())),
                            preferred_element_type=jnp.float32)        # (H, tb) f32
        z = jnp.maximum(z + b1_ref[...], 0.0)
        e = lax.dot_general(w2t_ref[...], z.astype(w2t_ref.dtype),
                            (((1,), (0,)), ((), ())),
                            preferred_element_type=jnp.float32)        # (E, tb) f32
        return e + b2_ref[...]

    gx = embed_t(g_ref[...])                         # (E, tb)
    hx = embed_t(h_ref[...])                         # (E, tb)
    d = jnp.maximum(gx - hx, 0.0)                    # relu(gx - hx)
    # Sublane-axis (E) reduction -> (1, tb): XLU reduce, output is a full-width
    # unmasked lane-dense store.  Garbage lanes of a ragged final tile are simply
    # discarded by the masked output writeback.
    dist_sq = jnp.sum(d * d, axis=0, keepdims=True)
    out_ref[...] = jnp.sqrt(dist_sq)


def _pick_tb(B, tb_max):
    """Largest lane-multiple tile <= tb_max that keeps the grid >= 2 when B allows.

    Keeps both v7x TensorCores fed (grid split via dimension_semantics) and keeps
    pipeline overlap on v5e/v6e; for B <= 128 a single 128-row tile is the floor.
    """
    if B <= 128:
        return 128
    half = pl.cdiv(B, 2)
    half = pl.cdiv(half, 128) * 128      # round up to a multiple of 128
    return int(max(128, min(tb_max, half)))


def siamese_forward(g, h, w1, b1, w2, b2, *, tb=512, compute_dtype=jnp.bfloat16):
    """forward(g, h) -> (B,) asymmetric embedding distances."""
    B, D = g.shape
    H = w1.shape[1]
    E = w2.shape[1]

    tb = _pick_tb(B, tb)
    grid = pl.cdiv(B, tb)

    # Only the tiny weights/biases are touched wrapper-side; g/h go straight to the
    # kernel in their native dtype (pass bf16 inputs to halve input HBM traffic).
    w1t = jnp.asarray(w1, compute_dtype).T.reshape(H, D)   # (H, D)
    w2t = jnp.asarray(w2, compute_dtype).T.reshape(E, H)   # (E, H)
    b1c = jnp.asarray(b1, jnp.float32).reshape(H, 1)
    b2c = jnp.asarray(b2, jnp.float32).reshape(E, 1)

    w_item = jnp.dtype(compute_dtype).itemsize
    cost = pl.CostEstimate(
        flops=2 * (2 * B) * (D * H + H * E) + 4 * B * E,
        transcendentals=B,
        bytes_accessed=int(g.size) * g.dtype.itemsize
        + int(h.size) * h.dtype.itemsize
        + (D * H + H * E) * w_item + (H + E) * 4 + B * 4,
    )

    # VMEM per step: double-buffered g/h tiles (tb=512, f32, lane-padded to 128) is
    # ~1 MiB total + resident weights + a (1, tb) output row -- far below the 32 MiB
    # scoped default on v5e/v6e/v7x, so no vmem_limit override is needed.
    out = pl.pallas_call(
        siamese_kernel,
        out_shape=jax.ShapeDtypeStruct((1, B), jnp.float32),
        grid_spec=pltpu.PrefetchScalarGridSpec(
            num_scalar_prefetch=0,
            grid=(grid,),
            in_specs=[
                pl.BlockSpec((tb, D), lambda i: (i, 0)),   # g tile
                pl.BlockSpec((tb, D), lambda i: (i, 0)),   # h tile
                pl.BlockSpec((H, D), lambda i: (0, 0)),    # weights: DMA'd once,
                pl.BlockSpec((H, 1), lambda i: (0, 0)),    # stay VMEM-resident
                pl.BlockSpec((E, H), lambda i: (0, 0)),
                pl.BlockSpec((E, 1), lambda i: (0, 0)),
            ],
            out_specs=pl.BlockSpec((1, tb), lambda i: (0, i)),  # lane-dense output
        ),
        compiler_params=pltpu.CompilerParams(
            dimension_semantics=("parallel",)),                 # megacore on v7x
        cost_estimate=cost,
    )(g, h, w1t, b1c, w2t, b2c)

    return out[0]


def reference_forward(g, h, w1, b1, w2, b2, compute_dtype=jnp.float32):
    cd = compute_dtype

    def embed(x):
        z = jnp.dot(x.astype(cd), w1.astype(cd),
                    preferred_element_type=jnp.float32) + b1
        z = jnp.maximum(z, 0.0)
        return jnp.dot(z.astype(cd), w2.astype(cd),
                       preferred_element_type=jnp.float32) + b2

    gx, hx = embed(g), embed(h)
    d = jnp.maximum(gx - hx, 0.0)
    return jnp.sqrt(jnp.sum(d * d, axis=-1))


if __name__ == "__main__":
    # Two batch tiles (tb auto-picks 128 here) + a ragged final tile exercise the
    # grid, the megacore split, and the unpadded tail path.
    B, D_IN, H, E = 200, 32, 64, 32

    key = jax.random.PRNGKey(0)
    kg, kh, k1, k2, k3, k4 = jax.random.split(key, 6)

    g = jax.random.normal(kg, (B, D_IN), dtype=jnp.float32)
    h = jax.random.normal(kh, (B, D_IN), dtype=jnp.float32)

    w1 = jax.random.normal(k1, (D_IN, H), dtype=jnp.float32) / jnp.sqrt(D_IN)
    b1 = 0.01 * jax.random.normal(k2, (1, H), dtype=jnp.float32)
    w2 = jax.random.normal(k3, (H, E), dtype=jnp.float32) / jnp.sqrt(H)
    b2 = 0.01 * jax.random.normal(k4, (1, E), dtype=jnp.float32)

    # Default path: bf16 matmul operands (all chip generations), f32 accumulation,
    # bias/ReLU/distance in f32 -- compared against a bf16-matmul reference.
    out_bf16 = jax.block_until_ready(siamese_forward(g, h, w1, b1, w2, b2))
    ref_bf16 = reference_forward(g, h, w1, b1, w2, b2, compute_dtype=jnp.bfloat16)
    assert out_bf16.shape == (B,)
    assert jnp.allclose(out_bf16, ref_bf16, atol=2e-2, rtol=2e-2), (out_bf16, ref_bf16)

    # f32 mode: parity with the f32 reference.
    out_f32 = jax.block_until_ready(
        siamese_forward(g, h, w1, b1, w2, b2, compute_dtype=jnp.float32))
    ref_f32 = reference_forward(g, h, w1, b1, w2, b2, compute_dtype=jnp.float32)
    assert out_f32.shape == (B,)
    assert jnp.allclose(out_f32, ref_f32, atol=1e-3, rtol=1e-3), (out_f32, ref_f32)

    print("KERNEL_OK")
</pallas_src>

<mosaic_0001>
module attributes {stable_mosaic.version = 11 : i64} {
  func.func @siamese_kernel(%arg0: i32, %arg1: memref<128x32xf32, #tpu.memory_space<vmem>>, %arg2: memref<128x32xf32, #tpu.memory_space<vmem>>, %arg3: memref<64x32xbf16, #tpu.memory_space<vmem>>, %arg4: memref<64x1xf32, #tpu.memory_space<vmem>>, %arg5: memref<32x64xbf16, #tpu.memory_space<vmem>>, %arg6: memref<32x1xf32, #tpu.memory_space<vmem>>, %arg7: memref<1x128xf32, #tpu.memory_space<vmem>>) attributes {dimension_semantics = [#tpu.dimension_semantics<parallel>], iteration_bounds = array<i64: 2>, scalar_prefetch = 0 : i64, scratch_operands = 0 : i64, tpu.core_type = #tpu.core_type<tc>, window_params = [{transform_indices = @transform_0, window_bounds = array<i64: 128, 32>}, {transform_indices = @transform_1, window_bounds = array<i64: 128, 32>}, {pipeline_mode = #tpu.pipeline_mode<synchronous>, transform_indices = @transform_2, window_bounds = array<i64: 64, 32>}, {pipeline_mode = #tpu.pipeline_mode<synchronous>, transform_indices = @transform_3, window_bounds = array<i64: 64, 1>}, {pipeline_mode = #tpu.pipeline_mode<synchronous>, transform_indices = @transform_4, window_bounds = array<i64: 32, 64>}, {pipeline_mode = #tpu.pipeline_mode<synchronous>, transform_indices = @transform_5, window_bounds = array<i64: 32, 1>}, {transform_indices = @transform_6, window_bounds = array<i64: 1, 128>}]} {
    %c0 = arith.constant 0 : index
    %c0_0 = arith.constant 0 : index
    %0 = vector.load %arg1[%c0, %c0_0] : memref<128x32xf32, #tpu.memory_space<vmem>>, vector<128x32xf32>
    %1 = arith.truncf %0 : vector<128x32xf32> to vector<128x32xbf16>
    %c0_1 = arith.constant 0 : index
    %c0_2 = arith.constant 0 : index
    %2 = vector.load %arg3[%c0_1, %c0_2] : memref<64x32xbf16, #tpu.memory_space<vmem>>, vector<64x32xbf16>
    %cst = arith.constant dense<0.000000e+00> : vector<64x128xf32>
    %3 = tpu.matmul %2, %1, %cst {dimension_numbers = #tpu.dot_dimension_numbers<[1], [1], [0], [0], [0, 0, 1, 0], [], []>} : vector<64x32xbf16>, vector<128x32xbf16>, vector<64x128xf32> -> vector<64x128xf32>
    %c0_3 = arith.constant 0 : index
    %c0_4 = arith.constant 0 : index
    %4 = vector.load %arg4[%c0_3, %c0_4] : memref<64x1xf32, #tpu.memory_space<vmem>>, vector<64x1xf32>
    %5 = vector.broadcast %4 : vector<64x1xf32> to vector<64x128xf32>
    %6 = arith.addf %3, %5 : vector<64x128xf32>
    %cst_5 = arith.constant 0.000000e+00 : f32
    %7 = vector.broadcast %cst_5 : f32 to vector<64x128xf32>
    %8 = arith.maximumf %6, %7 : vector<64x128xf32>
    %c0_6 = arith.constant 0 : index
    %c0_7 = arith.constant 0 : index
    %9 = vector.load %arg5[%c0_6, %c0_7] : memref<32x64xbf16, #tpu.memory_space<vmem>>, vector<32x64xbf16>
    %10 = arith.truncf %8 : vector<64x128xf32> to vector<64x128xbf16>
    %cst_8 = arith.constant dense<0.000000e+00> : vector<32x128xf32>
    %11 = tpu.matmul %9, %10, %cst_8 {dimension_numbers = #tpu.dot_dimension_numbers<[1], [0], [0], [1], [0, 0, 1, 1], [], []>} : vector<32x64xbf16>, vector<64x128xbf16>, vector<32x128xf32> -> vector<32x128xf32>
    %c0_9 = arith.constant 0 : index
    %c0_10 = arith.constant 0 : index
    %12 = vector.load %arg6[%c0_9, %c0_10] : memref<32x1xf32, #tpu.memory_space<vmem>>, vector<32x1xf32>
    %13 = vector.broadcast %12 : vector<32x1xf32> to vector<32x128xf32>
    %14 = arith.addf %11, %13 : vector<32x128xf32>
    %c0_11 = arith.constant 0 : index
    %c0_12 = arith.constant 0 : index
    %15 = vector.load %arg2[%c0_11, %c0_12] : memref<128x32xf32, #tpu.memory_space<vmem>>, vector<128x32xf32>
    %16 = arith.truncf %15 : vector<128x32xf32> to vector<128x32xbf16>
    %c0_13 = arith.constant 0 : index
    %c0_14 = arith.constant 0 : index
    %17 = vector.load %arg3[%c0_13, %c0_14] : memref<64x32xbf16, #tpu.memory_space<vmem>>, vector<64x32xbf16>
    %cst_15 = arith.constant dense<0.000000e+00> : vector<64x128xf32>
    %18 = tpu.matmul %17, %16, %cst_15 {dimension_numbers = #tpu.dot_dimension_numbers<[1], [1], [0], [0], [0, 0, 1, 0], [], []>} : vector<64x32xbf16>, vector<128x32xbf16>, vector<64x128xf32> -> vector<64x128xf32>
    %c0_16 = arith.constant 0 : index
    %c0_17 = arith.constant 0 : index
    %19 = vector.load %arg4[%c0_16, %c0_17] : memref<64x1xf32, #tpu.memory_space<vmem>>, vector<64x1xf32>
    %20 = vector.broadcast %19 : vector<64x1xf32> to vector<64x128xf32>
    %21 = arith.addf %18, %20 : vector<64x128xf32>
    %cst_18 = arith.constant 0.000000e+00 : f32
    %22 = vector.broadcast %cst_18 : f32 to vector<64x128xf32>
    %23 = arith.maximumf %21, %22 : vector<64x128xf32>
    %c0_19 = arith.constant 0 : index
    %c0_20 = arith.constant 0 : index
    %24 = vector.load %arg5[%c0_19, %c0_20] : memref<32x64xbf16, #tpu.memory_space<vmem>>, vector<32x64xbf16>
    %25 = arith.truncf %23 : vector<64x128xf32> to vector<64x128xbf16>
    %cst_21 = arith.constant dense<0.000000e+00> : vector<32x128xf32>
    %26 = tpu.matmul %24, %25, %cst_21 {dimension_numbers = #tpu.dot_dimension_numbers<[1], [0], [0], [1], [0, 0, 1, 1], [], []>} : vector<32x64xbf16>, vector<64x128xbf16>, vector<32x128xf32> -> vector<32x128xf32>
    %c0_22 = arith.constant 0 : index
    %c0_23 = arith.constant 0 : index
    %27 = vector.load %arg6[%c0_22, %c0_23] : memref<32x1xf32, #tpu.memory_space<vmem>>, vector<32x1xf32>
    %28 = vector.broadcast %27 : vector<32x1xf32> to vector<32x128xf32>
    %29 = arith.addf %26, %28 : vector<32x128xf32>
    %30 = arith.subf %14, %29 : vector<32x128xf32>
    %cst_24 = arith.constant 0.000000e+00 : f32
    %31 = vector.broadcast %cst_24 : f32 to vector<32x128xf32>
    %32 = arith.maximumf %30, %31 : vector<32x128xf32>
    %33 = arith.mulf %32, %32 : vector<32x128xf32>
    %cst_25 = arith.constant dense<0.000000e+00> : vector<128xf32>
    %34 = vector.multi_reduction <add>, %33, %cst_25 [0] : vector<32x128xf32> to vector<128xf32>
    %35 = vector.shape_cast %34 : vector<128xf32> to vector<1x128xf32>
    %36 = math.sqrt %35 : vector<1x128xf32>
    %c0_26 = arith.constant 0 : index
    %c0_27 = arith.constant 0 : index
    %37 = vector.load %arg7[%c0_26, %c0_27] : memref<1x128xf32, #tpu.memory_space<vmem>>, vector<1x128xf32>
    tpu.vector_store %arg7[%c0_26, %c0_27], %36 {strides = array<i32>} : memref<1x128xf32, #tpu.memory_space<vmem>>, vector<1x128xf32>,
    return
  }
  func.func @transform_0(%arg0: i32) -> (i32, i32) {
    %c0_i32 = arith.constant 0 : i32
    %c0_i32_0 = arith.constant 0 : i32
    return %arg0, %c0_i32 : i32, i32
  }
  func.func @transform_1(%arg0: i32) -> (i32, i32) {
    %c0_i32 = arith.constant 0 : i32
    %c0_i32_0 = arith.constant 0 : i32
    return %arg0, %c0_i32 : i32, i32
  }
  func.func @transform_2(%arg0: i32) -> (i32, i32) {
    %c0_i32 = arith.constant 0 : i32
    %c0_i32_0 = arith.constant 0 : i32
    %c0_i32_1 = arith.constant 0 : i32
    return %c0_i32, %c0_i32_0 : i32, i32
  }
  func.func @transform_3(%arg0: i32) -> (i32, i32) {
    %c0_i32 = arith.constant 0 : i32
    %c0_i32_0 = arith.constant 0 : i32
    %c0_i32_1 = arith.constant 0 : i32
    return %c0_i32, %c0_i32_0 : i32, i32
  }
  func.func @transform_4(%arg0: i32) -> (i32, i32) {
    %c0_i32 = arith.constant 0 : i32
    %c0_i32_0 = arith.constant 0 : i32
    %c0_i32_1 = arith.constant 0 : i32
    return %c0_i32, %c0_i32_0 : i32, i32
  }
  func.func @transform_5(%arg0: i32) -> (i32, i32) {
    %c0_i32 = arith.constant 0 : i32
    %c0_i32_0 = arith.constant 0 : i32
    %c0_i32_1 = arith.constant 0 : i32
    return %c0_i32, %c0_i32_0 : i32, i32
  }
  func.func @transform_6(%arg0: i32) -> (i32, i32) {
    %c0_i32 = arith.constant 0 : i32
    %c0_i32_0 = arith.constant 0 : i32
    return %c0_i32, %arg0 : i32, i32
  }
}

</mosaic_0001>

<llo_original>
// kernel: tpu_custom_call.1
$region0: #{tpu_custom_call.1}
  #allocation0 [shape = 'u32[]', space=smem, size = 0x4, offset = 0x4, fixed_abs, tag = 'smem constant byte address 0x4 - core index']
  #allocation1 [shape = 'u32[144,128]{1,0:T(1,128)}', space=vmem, size = 0x12000, scoped, tag = 'internal scratch']
  %s0 = inlined_call_operand.vmem [shape: f32[200,32], index: 0, kind: input, shape index: {}]
  %s1 = inlined_call_operand.vmem [shape: f32[200,32], index: 1, kind: input, shape index: {}]
  %s2 = inlined_call_operand.vmem [shape: bf16[64,32], index: 2, kind: input, shape index: {}]
  %s3 = inlined_call_operand.vmem [shape: f32[64,1], index: 3, kind: input, shape index: {}]
  %s4 = inlined_call_operand.vmem [shape: bf16[32,64], index: 4, kind: input, shape index: {}]
  %s5 = inlined_call_operand.vmem [shape: f32[32,1], index: 5, kind: input, shape index: {}]
  %s6 = inlined_call_operand.hbm [shape: f32[1,200], index: 6, kind: output, shape index: {}]
  %s7 = sld [smem:[#allocation0]]
  $region57: #{tpu_custom_call.1} parent=0
    _
  %s9 = ssub.s32 1, %s7
  %s10 = scalar_select 0, %s9, %s7
  $region1: #{tpu_custom_call.1} parent=0
    #allocation2 [shape = 'u8[1024]{0}', space=vmem, size = 0x400, scoped, tag = 'output window, operand 0']
    #allocation3 [shape = 's32[2]{0}', space=sflag, size = 0x8, scoped, tag = 'scoped memory for tpu_custom_call.1']
    %11 = vsyncpa [#allocation3], 0
    %s12 = scalar_lea.sflag [#allocation3], 1
    %13 = vsyncpa %s12, 0
    loop: start=0, step=1, limit=4
    $region2: #{tpu_custom_call.1} parent=1 // loop_pre_header
      _
    $region3: #{tpu_custom_call.1} parent=1 // loop_header
      %s15 = sphi 0, %s19
      %p16 = scmp.ge.s32.totalorder %s15, 4
      %s25 = sphi 0, %s27
      %s28 = sphi 0, %s25
      %s29 = sphi 0, %s28
      %s45 = sphi 0, %s29
      %s51 = sphi 0, %s53
      %s54 = sphi 0, %s51
      %s55 = sphi 0, %s54
      %s71 = sphi 0, %s55
      %s75 = sphi 0, %s75
      %s77 = sphi 0, %s75
      %s78 = sphi 0, %s77
      %s92 = sphi 0, %s78
      %s96 = sphi 0, %s96
      %s98 = sphi 0, %s96
      %s99 = sphi 0, %s98
      %s113 = sphi 0, %s99
      %s117 = sphi 0, %s117
      %s119 = sphi 0, %s117
      %s120 = sphi 0, %s119
      %s134 = sphi 0, %s120
      %s138 = sphi 0, %s138
      %s140 = sphi 0, %s138
      %s141 = sphi 0, %s140
      %s155 = sphi 0, %s141
      %s161 = sphi 0, %s163
      %s164 = sphi 0, %s161
      %s165 = sphi 0, %s164
      %s181 = sphi 0, %s165
    $region4: #{tpu_custom_call.1} parent=1 // loop_header_branch
      %18 = sbr.rel (%p16) target = $region8
    $region5: #{tpu_custom_call.1} parent=1 // loop_body
      %s20 = ssub.s32 %s15, 1
      %s21 = ssub.s32 %s15, 2
      %s22 = sadd.s32 %s15, 1
      %s23 = ssub.s32 %s15, %s22
      %p24 = scmp.eq.s32.totalorder %s23, 0
      %s26 = sadd.s32 %s25, 1
      %s27 = scalar_select %p24, %s25, %s26
      %p30 = pneg %p24
      %p31 = scmp.eq.s32.totalorder %s15, 1
      %p32 = por %p30, %p31
      %p33 = scmp.ne.s32.totalorder %s25, %s28
      %p34 = scmp.eq.s32.totalorder %s15, 0
      %p35 = por %p33, %p34
      %p36 = scmp.ne.s32.totalorder %s25, %s28
      %p37 = scmp.eq.s32.totalorder %s20, 1
      %p38 = por %p36, %p37
      %p39 = scmp.ne.s32.totalorder %s28, %s29
      %p40 = scmp.eq.s32.totalorder %s20, 0
      %p41 = por %p39, %p40
      %p42 = scmp.ne.s32.totalorder %s28, %s29
      %p43 = scmp.eq.s32.totalorder %s21, 1
      %p44 = por %p42, %p43
      %p46 = scmp.ne.s32.totalorder %s29, %s45
      %p47 = scmp.eq.s32.totalorder %s21, 0
      %p48 = por %p46, %p47
      %s49 = ssub.s32 %s15, %s22
      %p50 = scmp.eq.s32.totalorder %s49, 0
      %s52 = sadd.s32 %s51, 1
      %s53 = scalar_select %p50, %s51, %s52
      %p56 = pneg %p50
      %p57 = scmp.eq.s32.totalorder %s15, 1
      %p58 = por %p56, %p57
      %p59 = scmp.ne.s32.totalorder %s51, %s54
      %p60 = scmp.eq.s32.totalorder %s15, 0
      %p61 = por %p59, %p60
      %p62 = scmp.ne.s32.totalorder %s51, %s54
      %p63 = scmp.eq.s32.totalorder %s20, 1
      %p64 = por %p62, %p63
      %p65 = scmp.ne.s32.totalorder %s54, %s55
      %p66 = scmp.eq.s32.totalorder %s20, 0
      %p67 = por %p65, %p66
      %p68 = scmp.ne.s32.totalorder %s54, %s55
      %p69 = scmp.eq.s32.totalorder %s21, 1
      %p70 = por %p68, %p69
      %p72 = scmp.ne.s32.totalorder %s55, %s71
      %p73 = scmp.eq.s32.totalorder %s21, 0
      %p74 = por %p72, %p73
      %s76 = sadd.s32 %s75, 1
      %p79 = scmp.eq.s32.totalorder %s15, 1
      %p80 = scmp.ne.s32.totalorder %s75, %s77
      %p81 = scmp.eq.s32.totalorder %s15, 0
      %p82 = por %p80, %p81
      %p83 = scmp.ne.s32.totalorder %s75, %s77
      %p84 = scmp.eq.s32.totalorder %s20, 1
      %p85 = por %p83, %p84
      %p86 = scmp.ne.s32.totalorder %s77, %s78
      %p87 = scmp.eq.s32.totalorder %s20, 0
      %p88 = por %p86, %p87
      %p89 = scmp.ne.s32.totalorder %s77, %s78
      %p90 = scmp.eq.s32.totalorder %s21, 1
      %p91 = por %p89, %p90
      %p93 = scmp.ne.s32.totalorder %s78, %s92
      %p94 = scmp.eq.s32.totalorder %s21, 0
      %p95 = por %p93, %p94
      %s97 = sadd.s32 %s96, 1
      %p100 = scmp.eq.s32.totalorder %s15, 1
      %p101 = scmp.ne.s32.totalorder %s96, %s98
      %p102 = scmp.eq.s32.totalorder %s15, 0
      %p103 = por %p101, %p102
      %p104 = scmp.ne.s32.totalorder %s96, %s98
      %p105 = scmp.eq.s32.totalorder %s20, 1
      %p106 = por %p104, %p105
      %p107 = scmp.ne.s32.totalorder %s98, %s99
      %p108 = scmp.eq.s32.totalorder %s20, 0
      %p109 = por %p107, %p108
      %p110 = scmp.ne.s32.totalorder %s98, %s99
      %p111 = scmp.eq.s32.totalorder %s21, 1
      %p112 = por %p110, %p111
      %p114 = scmp.ne.s32.totalorder %s99, %s113
      %p115 = scmp.eq.s32.totalorder %s21, 0
      %p116 = por %p114, %p115
      %s118 = sadd.s32 %s117, 1
      %p121 = scmp.eq.s32.totalorder %s15, 1
      %p122 = scmp.ne.s32.totalorder %s117, %s119
      %p123 = scmp.eq.s32.totalorder %s15, 0
      %p124 = por %p122, %p123
      %p125 = scmp.ne.s32.totalorder %s117, %s119
      %p126 = scmp.eq.s32.totalorder %s20, 1
      %p127 = por %p125, %p126
      %p128 = scmp.ne.s32.totalorder %s119, %s120
      %p129 = scmp.eq.s32.totalorder %s20, 0
      %p130 = por %p128, %p129
      %p131 = scmp.ne.s32.totalorder %s119, %s120
      %p132 = scmp.eq.s32.totalorder %s21, 1
      %p133 = por %p131, %p132
      %p135 = scmp.ne.s32.totalorder %s120, %s134
      %p136 = scmp.eq.s32.totalorder %s21, 0
      %p137 = por %p135, %p136
      %s139 = sadd.s32 %s138, 1
      %p142 = scmp.eq.s32.totalorder %s15, 1
      %p143 = scmp.ne.s32.totalorder %s138, %s140
      %p144 = scmp.eq.s32.totalorder %s15, 0
      %p145 = por %p143, %p144
      %p146 = scmp.ne.s32.totalorder %s138, %s140
      %p147 = scmp.eq.s32.totalorder %s20, 1
      %p148 = por %p146, %p147
      %p149 = scmp.ne.s32.totalorder %s140, %s141
      %p150 = scmp.eq.s32.totalorder %s20, 0
      %p151 = por %p149, %p150
      %p152 = scmp.ne.s32.totalorder %s140, %s141
      %p153 = scmp.eq.s32.totalorder %s21, 1
      %p154 = por %p152, %p153
      %p156 = scmp.ne.s32.totalorder %s141, %s155
      %p157 = scmp.eq.s32.totalorder %s21, 0
      %p158 = por %p156, %p157
      %s159 = ssub.s32 %s15, %s22
      %p160 = scmp.eq.s32.totalorder %s159, 0
      %s162 = sadd.s32 %s161, 1
      %s163 = scalar_select %p160, %s161, %s162
      %p166 = pneg %p160
      %p167 = scmp.eq.s32.totalorder %s15, 1
      %p168 = por %p166, %p167
      %p169 = scmp.ne.s32.totalorder %s161, %s164
      %p170 = scmp.eq.s32.totalorder %s15, 0
      %p171 = por %p169, %p170
      %p172 = scmp.ne.s32.totalorder %s161, %s164
      %p173 = scmp.eq.s32.totalorder %s20, 1
      %p174 = por %p172, %p173
      %p175 = scmp.ne.s32.totalorder %s164, %s165
      %p176 = scmp.eq.s32.totalorder %s20, 0
      %p177 = por %p175, %p176
      %p178 = scmp.ne.s32.totalorder %s164, %s165
      %p179 = scmp.eq.s32.totalorder %s21, 1
      %p180 = por %p178, %p179
      %p182 = scmp.ne.s32.totalorder %s165, %s181
      %p183 = scmp.eq.s32.totalorder %s21, 0
      %p184 = por %p182, %p183
      %p185 = scmp.le.s32.totalorder 1, %s15
      %p186 = scmp.lt.s32.totalorder %s15, 3
      %p187 = pnand %p185, %p186
      %p188 = pneg %p187
      // Predicated region
      $region9: #{tpu_custom_call.1} parent=5 // pred_check
        _
      $region10: #{tpu_custom_call.1} parent=5 // pred_check_branch
        %190 = sbr.rel (%p187) target = $region12
      $region11: #{tpu_custom_call.1} parent=5 // pred_region
        %s191 = ssub.s32 %s15, 1
        // Predicated region
        $region13: #{tpu_custom_call.1} parent=11 // pred_check
          %p192 = pneg %p88
        $region14: #{tpu_custom_call.1} parent=11 // pred_check_branch
          %194 = sbr.rel (%p192) target = $region16
        $region15: #{tpu_custom_call.1} parent=11 // pred_region
          _
        $region16: #{tpu_custom_call.1} parent=11 // pred_fallthru
          _
        // Predicated region
        $region17: #{tpu_custom_call.1} parent=11 // pred_check
          %p195 = pneg %p109
        $region18: #{tpu_custom_call.1} parent=11 // pred_check_branch
          %197 = sbr.rel (%p195) target = $region20
        $region19: #{tpu_custom_call.1} parent=11 // pred_region
          _
        $region20: #{tpu_custom_call.1} parent=11 // pred_fallthru
          _
        // Predicated region
        $region21: #{tpu_custom_call.1} parent=11 // pred_check
          %p198 = pneg %p130
        $region22: #{tpu_custom_call.1} parent=11 // pred_check_branch
          %200 = sbr.rel (%p198) target = $region24
        $region23: #{tpu_custom_call.1} parent=11 // pred_region
          _
        $region24: #{tpu_custom_call.1} parent=11 // pred_fallthru
          _
        // Predicated region
        $region25: #{tpu_custom_call.1} parent=11 // pred_check
          %p201 = pneg %p151
        $region26: #{tpu_custom_call.1} parent=11 // pred_check_branch
          %203 = sbr.rel (%p201) target = $region28
        $region27: #{tpu_custom_call.1} parent=11 // pred_region
          _
        $region28: #{tpu_custom_call.1} parent=11 // pred_fallthru
          _
      $region12: #{tpu_custom_call.1} parent=5 // pred_fallthru
        _
      %p204 = scmp.lt.s32.totalorder %s15, 2
      // Predicated region
      $region29: #{tpu_custom_call.1} parent=5 // pred_check
        %p205 = pneg %p204
      $region30: #{tpu_custom_call.1} parent=5 // pred_check_branch
        %207 = sbr.rel (%p205) target = $region32
      $region31: #{tpu_custom_call.1} parent=5 // pred_region
        // Predicated region
        $region33: #{tpu_custom_call.1} parent=31 // pred_check
          %p208 = pneg %p35
        $region34: #{tpu_custom_call.1} parent=31 // pred_check_branch
          %210 = sbr.rel (%p208) target = $region36
        $region35: #{tpu_custom_call.1} parent=31 // pred_region
          %s211 = smul.u32 16, %s15
          %s212 = ssub.s32 25, %s211
          %p213 = scmp.lt.s32.totalorder %s212, 16
          %s214 = scalar_select %p213, %s212, 16
          %s215 = smul.u32 128, %s214
          %p216 = scmp.lt.s32.totalorder %s211, 24
          %s217 = scalar_select %p216, %s211, 24
          %s218 = smul.addr %s217, 8
          %s219 = scalar_lea.vmem %s0, %s218
          %s220 = smul.u32 16, %s15
          %s221 = ssub.s32 25, %s220
          %p222 = scmp.lt.s32.totalorder %s221, 16
          %s223 = scalar_select %p222, %s221, 16
          %s224 = smul.u32 128, %s223
        $region36: #{tpu_custom_call.1} parent=31 // pred_fallthru
          _
        // Predicated region
        $region37: #{tpu_custom_call.1} parent=31 // pred_check
          %p225 = pneg %p61
        $region38: #{tpu_custom_call.1} parent=31 // pred_check_branch
          %227 = sbr.rel (%p225) target = $region40
        $region39: #{tpu_custom_call.1} parent=31 // pred_region
          %s228 = smul.u32 16, %s15
          %s229 = ssub.s32 25, %s228
          %p230 = scmp.lt.s32.totalorder %s229, 16
          %s231 = scalar_select %p230, %s229, 16
          %s232 = smul.u32 128, %s231
          %p233 = scmp.lt.s32.totalorder %s228, 24
          %s234 = scalar_select %p233, %s228, 24
          %s235 = smul.addr %s234, 8
          %s236 = scalar_lea.vmem %s1, %s235
          %s237 = smul.u32 16, %s15
          %s238 = ssub.s32 25, %s237
          %p239 = scmp.lt.s32.totalorder %s238, 16
          %s240 = scalar_select %p239, %s238, 16
          %s241 = smul.u32 128, %s240
        $region40: #{tpu_custom_call.1} parent=31 // pred_fallthru
          _
      $region32: #{tpu_custom_call.1} parent=5 // pred_fallthru
        _
      %p242 = scmp.le.s32.totalorder 1, %s15
      %p243 = scmp.lt.s32.totalorder %s15, 3
      %p244 = pnand %p242, %p243
      %p245 = pneg %p244
      // Predicated region
      $region41: #{tpu_custom_call.1} parent=5 // pred_check
        _
      $region42: #{tpu_custom_call.1} parent=5 // pred_check_branch
        %247 = sbr.rel (%p244) target = $region44
      $region43: #{tpu_custom_call.1} parent=5 // pred_region
        %s248 = ssub.s32 %s15, 1
        %s249 = smul.u32 16, %s20
        %s250 = ssub.s32 25, %s249
        %p251 = scmp.lt.s32.totalorder %s250, 16
        %s252 = scalar_select %p251, %s250, 16
        %s253 = smul.u32 128, %s252
        %p254 = scmp.lt.s32.totalorder %s249, 24
        %s255 = scalar_select %p254, %s249, 24
        %s256 = smul.addr %s255, 8
        %s257 = scalar_lea.vmem %s0, %s256
        %p258 = pneg %p41
        %p259 = pneg %p38
        %s260 = smul.u32 16, %s20
        %s261 = ssub.s32 25, %s260
        %p262 = scmp.lt.s32.totalorder %s261, 16
        %s263 = scalar_select %p262, %s261, 16
        %s264 = smul.u32 128, %s263
        %p265 = scmp.lt.s32.totalorder %s260, 24
        %s266 = scalar_select %p265, %s260, 24
        %s267 = smul.addr %s266, 8
        %s268 = scalar_lea.vmem %s1, %s267
        %p269 = pneg %p67
        %p270 = pneg %p64
        %p271 = pneg %p88
        %p272 = pneg %p85
        %p273 = pneg %p109
        %p274 = pneg %p106
        %p275 = pneg %p130
        %p276 = pneg %p127
        %p277 = pneg %p151
        %p278 = pneg %p148
        %p279 = pneg %p177
        %p280 = pneg %p174
        %s281 = sand.u32 %s164, 1
        %s282 = scalar_lea.sflag [#allocation3], %s281
        %s283 = sand.u32 %s164, 1
        %s284 = scalar_lea.vmem [#allocation2], %s283
        %s285 = smul.u32 16, %s20
        %s286 = ssub.s32 25, %s285
        %p287 = scmp.lt.s32.totalorder %s286, 16
        %s288 = scalar_select %p287, %s286, 16
        %s289 = smul.u32 128, %s288
        %p290 = scmp.lt.s32.totalorder %s285, 24
        %s291 = scalar_select %p290, %s285, 24
        %s292 = smul.addr %s291, 8
        %s293 = scalar_lea.vmem %s0, %s292
        %s294 = smul.u32 16, %s20
        %s295 = ssub.s32 25, %s294
        %p296 = scmp.lt.s32.totalorder %s295, 16
        %s297 = scalar_select %p296, %s295, 16
        %s298 = smul.u32 128, %s297
        %s299 = smul.u32 16, %s20
        %s300 = ssub.s32 25, %s299
        %p301 = scmp.lt.s32.totalorder %s300, 16
        %s302 = scalar_select %p301, %s300, 16
        %s303 = smul.u32 128, %s302
        %p304 = scmp.lt.s32.totalorder %s299, 24
        %s305 = scalar_select %p304, %s299, 24
        %s306 = smul.addr %s305, 8
        %s307 = scalar_lea.vmem %s1, %s306
        %s308 = smul.u32 16, %s20
        %s309 = ssub.s32 25, %s308
        %p310 = scmp.lt.s32.totalorder %s309, 16
        %s311 = scalar_select %p310, %s309, 16
        %s312 = smul.u32 128, %s311
        %v314 = vld [vmem:[%s293] sm:$0xff]
        %v315 = vld [vmem:[%s293 + $0x8] sm:$0xff]
        %v316 = vld [vmem:[%s293 + $0x10] sm:$0xff]
        %v317 = vld [vmem:[%s293 + $0x18] sm:$0xff]
        %v318 = vld [vmem:[%s293 + $0x20] sm:$0xff]
        %v319 = vld [vmem:[%s293 + $0x28] sm:$0xff]
        %v320 = vld [vmem:[%s293 + $0x30] sm:$0xff]
        %v321 = vld [vmem:[%s293 + $0x38] sm:$0xff]
        %v322 = vld [vmem:[%s293 + $0x40] sm:$0xff]
        %v323 = vld [vmem:[%s293 + $0x48] sm:$0xff]
        %v324 = vld [vmem:[%s293 + $0x50] sm:$0xff]
        %v325 = vld [vmem:[%s293 + $0x58] sm:$0xff]
        %v326 = vld [vmem:[%s293 + $0x60] sm:$0xff]
        %v327 = vld [vmem:[%s293 + $0x68] sm:$0xff]
        %v328 = vld [vmem:[%s293 + $0x70] sm:$0xff]
        %v329 = vld [vmem:[%s293 + $0x78] sm:$0xff]
        %v330 = vpack.c.bf16 %v315, %v314
        %v331 = vpack.c.bf16 %v317, %v316
        %v332 = vpack.c.bf16 %v319, %v318
        %v333 = vpack.c.bf16 %v321, %v320
        %v334 = vpack.c.bf16 %v323, %v322
        %v335 = vpack.c.bf16 %v325, %v324
        %v336 = vpack.c.bf16 %v327, %v326
        %v337 = vpack.c.bf16 %v329, %v328
        %v338 = vld [vmem:[%s2] sm:$0xf]
        %v339 = vld [vmem:[%s2 + $0x4] sm:$0xf]
        %v340 = vld [vmem:[%s2 + $0x8] sm:$0xf]
        %v341 = vld [vmem:[%s2 + $0xc] sm:$0xf]
        %v342 = vld [vmem:[%s2 + $0x10] sm:$0xf]
        %v343 = vld [vmem:[%s2 + $0x14] sm:$0xf]
        %v344 = vld [vmem:[%s2 + $0x18] sm:$0xf]
        %v345 = vld [vmem:[%s2 + $0x1c] sm:$0xf]
        %v346 = vld [vmem:[%s3] sm:$0xff]
        %v347 = vld [vmem:[%s3 + $0x8] sm:$0xff]
        %v348 = vld [vmem:[%s3 + $0x10] sm:$0xff]
        %v349 = vld [vmem:[%s3 + $0x18] sm:$0xff]
        %v350 = vld [vmem:[%s3 + $0x20] sm:$0xff]
        %v351 = vld [vmem:[%s3 + $0x28] sm:$0xff]
        %v352 = vld [vmem:[%s3 + $0x30] sm:$0xff]
        %v353 = vld [vmem:[%s3 + $0x38] sm:$0xff]
        %355 = vset.pattern.permute.xlu0 0
        %356 = vperm.xlu0 %355, %v346
        %v357 = vpop.permute.xlu0 %356
        %360 = vset.pattern.permute.xlu0 0
        %361 = vperm.xlu0 %360, %v347
        %v362 = vpop.permute.xlu0 %361
        %365 = vset.pattern.permute.xlu0 0
        %366 = vperm.xlu0 %365, %v348
        %v367 = vpop.permute.xlu0 %366
        %370 = vset.pattern.permute.xlu0 0
        %371 = vperm.xlu0 %370, %v349
        %v372 = vpop.permute.xlu0 %371
        %375 = vset.pattern.permute.xlu0 0
        %376 = vperm.xlu0 %375, %v350
        %v377 = vpop.permute.xlu0 %376
        %380 = vset.pattern.permute.xlu0 0
        %381 = vperm.xlu0 %380, %v351
        %v382 = vpop.permute.xlu0 %381
        %385 = vset.pattern.permute.xlu0 0
        %386 = vperm.xlu0 %385, %v352
        %v387 = vpop.permute.xlu0 %386
        %390 = vset.pattern.permute.xlu0 0
        %391 = vperm.xlu0 %390, %v353
        %v392 = vpop.permute.xlu0 %391
        %v402 = vunpack.c.l.b16 %v338
        %v403 = vunpack.c.l.b16 %v339
        %v404 = vunpack.c.l.b16 %v340
        %v405 = vunpack.c.l.b16 %v341
        %v406 = vunpack.c.l.b16 %v342
        %v407 = vunpack.c.l.b16 %v343
        %v408 = vunpack.c.l.b16 %v344
        %v409 = vunpack.c.l.b16 %v345
        %v410 = vpack.c.b16 %v403, %v402
        %v411 = vpack.c.b16 %v405, %v404
        %v412 = vpack.c.b16 %v407, %v406
        %v413 = vpack.c.b16 %v409, %v408
        %vm414 = vcmask 261120
        %v416 = vsel %vm414, %v410, 0
        %v419 = vsel %vm414, %v411, 0
        %v422 = vsel %vm414, %v412, 0
        %v425 = vsel %vm414, %v413, 0
        %v428 = vsel %vm414, %v330, 0
        %v431 = vsel %vm414, %v331, 0
        %v434 = vsel %vm414, %v332, 0
        %v437 = vsel %vm414, %v333, 0
        %v440 = vsel %vm414, %v334, 0
        %v443 = vsel %vm414, %v335, 0
        %v446 = vsel %vm414, %v336, 0
        %v449 = vsel %vm414, %v337, 0
        %451 = vmatprep.subr.bf16.mxu0 0
        %452 = vmatpush1.bf16.xpose.msra.mxu0 %v428
        %453 = vmatprep.subr.bf16.mxu0 0
        %454 = vmatpush1.bf16.xpose.msra.mxu0 %v431
        %455 = vmatprep.subr.bf16.mxu0 0
        %456 = vmatpush1.bf16.xpose.msra.mxu0 %v434
        %457 = vmatprep.subr.bf16.mxu0 0
        %458 = vmatpush1.bf16.xpose.msra.mxu0 %v437
        %459 = vmatprep.subr.bf16.mxu0 0
        %460 = vmatpush1.bf16.xpose.msra.mxu0 %v440
        %461 = vmatprep.subr.bf16.mxu0 0
        %462 = vmatpush1.bf16.xpose.msra.mxu0 %v443
        %463 = vmatprep.subr.bf16.mxu0 0
        %464 = vmatpush1.bf16.xpose.msra.mxu0 %v446
        %465 = vmatprep.subr.bf16.mxu0 0
        %466 = vmatpush1.bf16.xpose.msra.mxu0 %v449
        %467 = vmatprep.subr.bf16.mxu0 0
        %468 = vmatpush1.bf16.xpose.msra.mxu0 0
        %469 = vmatprep.subr.bf16.mxu0 0
        %470 = vmatpush1.bf16.xpose.msra.mxu0 0
        %471 = vmatprep.subr.bf16.mxu0 0
        %472 = vmatpush1.bf16.xpose.msra.mxu0 0
        %473 = vmatprep.subr.bf16.mxu0 0
        %474 = vmatpush1.bf16.xpose.msra.mxu0 0
        %475 = vmatprep.subr.bf16.mxu0 0
        %476 = vmatpush1.bf16.xpose.msra.mxu0 0
        %477 = vmatprep.subr.bf16.mxu0 0
        %478 = vmatpush1.bf16.xpose.msra.mxu0 0
        %479 = vmatprep.subr.bf16.mxu0 0
        %480 = vmatpush1.bf16.xpose.msra.mxu0 0
        %481 = vmatprep.subr.bf16.mxu0 0
        %482 = vmatpush1.bf16.xpose.msra.mxu0 0
        %483 = vmatprep.mubr.bf16.mxu0 0
        %484 = vmatmul.mubr.bf16.gmra.mrb[0].mxu0 %v416
        %v485 = vpop.f32.mrb[0].mxu0
        %v486 = vadd.f32 %v357, %v485
        %v487 = vpop.f32.mrb[0].mxu0
        %v488 = vpop.f32.mrb[0].mxu0
        %v489 = vadd.f32 %v362, %v488
        %v490 = vpop.f32.mrb[0].mxu0
        %491 = vmatprep.mubr.bf16.mxu0 0
        %492 = vmatmul.mubr.bf16.gmra.mrb[0].mxu0 %v419
        %v493 = vpop.f32.mrb[0].mxu0
        %v494 = vadd.f32 %v367, %v493
        %v495 = vpop.f32.mrb[0].mxu0
        %v496 = vpop.f32.mrb[0].mxu0
        %v497 = vadd.f32 %v372, %v496
        %v498 = vpop.f32.mrb[0].mxu0
        %499 = vmatprep.mubr.bf16.mxu0 0
        %500 = vmatmul.mubr.bf16.gmra.mrb[0].mxu0 %v422
        %v501 = vpop.f32.mrb[0].mxu0
        %v502 = vadd.f32 %v377, %v501
        %v503 = vpop.f32.mrb[0].mxu0
        %v504 = vpop.f32.mrb[0].mxu0
        %v505 = vadd.f32 %v382, %v504
        %v506 = vpop.f32.mrb[0].mxu0
        %507 = vmatprep.mubr.bf16.mxu0 0
        %508 = vmatmul.mubr.bf16.gmra.mrb[0].mxu0 %v425
        %v509 = vpop.f32.mrb[0].mxu0
        %v510 = vadd.f32 %v387, %v509
        %v511 = vpop.f32.mrb[0].mxu0
        %v512 = vpop.f32.mrb[0].mxu0
        %v513 = vadd.f32 %v392, %v512
        %v514 = vpop.f32.mrb[0].mxu0
        %515 = vdwg.mxu0
        %v516 = vmax.f32 %v486, 0.0
        %v517 = vmax.f32 %v489, 0.0
        %v518 = vmax.f32 %v494, 0.0
        %v519 = vmax.f32 %v497, 0.0
        %v520 = vmax.f32 %v502, 0.0
        %v521 = vmax.f32 %v505, 0.0
        %v522 = vmax.f32 %v510, 0.0
        %v523 = vmax.f32 %v513, 0.0
        %v524 = vld [vmem:[%s4] sm:$0xf]
        %v525 = vld [vmem:[%s4 + $0x4] sm:$0xf]
        %v526 = vld [vmem:[%s4 + $0x8] sm:$0xf]
        %v527 = vld [vmem:[%s4 + $0xc] sm:$0xf]
        %v528 = vpack.c.bf16 %v517, %v516
        %v529 = vpack.c.bf16 %v519, %v518
        %v530 = vpack.c.bf16 %v521, %v520
        %v531 = vpack.c.bf16 %v523, %v522
        %v532 = vld [vmem:[%s5] sm:$0xff]
        %v533 = vld [vmem:[%s5 + $0x8] sm:$0xff]
        %v534 = vld [vmem:[%s5 + $0x10] sm:$0xff]
        %v535 = vld [vmem:[%s5 + $0x18] sm:$0xff]
        %537 = vset.pattern.permute.xlu0 0
        %538 = vperm.xlu0 %537, %v532
        %v539 = vpop.permute.xlu0 %538
        %542 = vset.pattern.permute.xlu0 0
        %543 = vperm.xlu0 %542, %v533
        %v544 = vpop.permute.xlu0 %543
        %547 = vset.pattern.permute.xlu0 0
        %548 = vperm.xlu0 %547, %v534
        %v549 = vpop.permute.xlu0 %548
        %552 = vset.pattern.permute.xlu0 0
        %553 = vperm.xlu0 %552, %v535
        %v554 = vpop.permute.xlu0 %553
        %v560 = vunpack.c.l.b16 %v524
        %v561 = vunpack.c.l.b16 %v525
        %v562 = vunpack.c.l.b16 %v526
        %v563 = vunpack.c.l.b16 %v527
        %v564 = vpack.c.b16 %v561, %v560
        %v565 = vpack.c.b16 %v563, %v562
        %vm566 = vcmask 523264
        %v568 = vsel %vm566, %v564, 0
        %v571 = vsel %vm566, %v565, 0
        %573 = vmatprep.subr.bf16.mxu0 0
        %574 = vmatpush1.bf16.msra.mxu0 %v528
        %575 = vmatprep.subr.bf16.mxu0 0
        %576 = vmatpush1.bf16.msra.mxu0 %v529
        %577 = vmatprep.subr.bf16.mxu0 0
        %578 = vmatpush1.bf16.msra.mxu0 %v530
        %579 = vmatprep.subr.bf16.mxu0 0
        %580 = vmatpush1.bf16.msra.mxu0 %v531
        %581 = vmatprep.subr.bf16.mxu0 0
        %582 = vmatpush1.bf16.msra.mxu0 0
        %583 = vmatprep.subr.bf16.mxu0 0
        %584 = vmatpush1.bf16.msra.mxu0 0
        %585 = vmatprep.subr.bf16.mxu0 0
        %586 = vmatpush1.bf16.msra.mxu0 0
        %587 = vmatprep.subr.bf16.mxu0 0
        %588 = vmatpush1.bf16.msra.mxu0 0
        %589 = vmatprep.subr.bf16.mxu0 0
        %590 = vmatpush1.bf16.msra.mxu0 0
        %591 = vmatprep.subr.bf16.mxu0 0
        %592 = vmatpush1.bf16.msra.mxu0 0
        %593 = vmatprep.subr.bf16.mxu0 0
        %594 = vmatpush1.bf16.msra.mxu0 0
        %595 = vmatprep.subr.bf16.mxu0 0
        %596 = vmatpush1.bf16.msra.mxu0 0
        %597 = vmatprep.subr.bf16.mxu0 0
        %598 = vmatpush1.bf16.msra.mxu0 0
        %599 = vmatprep.subr.bf16.mxu0 0
        %600 = vmatpush1.bf16.msra.mxu0 0
        %601 = vmatprep.subr.bf16.mxu0 0
        %602 = vmatpush1.bf16.msra.mxu0 0
        %603 = vmatprep.subr.bf16.mxu0 0
        %604 = vmatpush1.bf16.msra.mxu0 0
        %605 = vmatprep.mubr.bf16.mxu0 0
        %606 = vmatmul.mubr.bf16.gmra.mrb[0].mxu0 %v568
        %v607 = vpop.f32.mrb[0].mxu0
        %v608 = vadd.f32 %v539, %v607
        %v609 = vpop.f32.mrb[0].mxu0
        %v610 = vpop.f32.mrb[0].mxu0
        %v611 = vadd.f32 %v544, %v610
        %v612 = vpop.f32.mrb[0].mxu0
        %613 = vmatprep.mubr.bf16.mxu0 0
        %614 = vmatmul.mubr.bf16.gmra.mrb[0].mxu0 %v571
        %v615 = vpop.f32.mrb[0].mxu0
        %v616 = vadd.f32 %v549, %v615
        %v617 = vpop.f32.mrb[0].mxu0
        %v618 = vpop.f32.mrb[0].mxu0
        %v619 = vadd.f32 %v554, %v618
        %v620 = vpop.f32.mrb[0].mxu0
        %621 = vdwg.mxu0
        %v622 = vld [vmem:[%s307] sm:$0xff]
        %v623 = vld [vmem:[%s307 + $0x8] sm:$0xff]
        %v624 = vld [vmem:[%s307 + $0x10] sm:$0xff]
        %v625 = vld [vmem:[%s307 + $0x18] sm:$0xff]
        %v626 = vld [vmem:[%s307 + $0x20] sm:$0xff]
        %v627 = vld [vmem:[%s307 + $0x28] sm:$0xff]
        %v628 = vld [vmem:[%s307 + $0x30] sm:$0xff]
        %v629 = vld [vmem:[%s307 + $0x38] sm:$0xff]
        %v630 = vld [vmem:[%s307 + $0x40] sm:$0xff]
        %v631 = vld [vmem:[%s307 + $0x48] sm:$0xff]
        %v632 = vld [vmem:[%s307 + $0x50] sm:$0xff]
        %v633 = vld [vmem:[%s307 + $0x58] sm:$0xff]
        %v634 = vld [vmem:[%s307 + $0x60] sm:$0xff]
        %v635 = vld [vmem:[%s307 + $0x68] sm:$0xff]
        %v636 = vld [vmem:[%s307 + $0x70] sm:$0xff]
        %v637 = vld [vmem:[%s307 + $0x78] sm:$0xff]
        %v638 = vpack.c.bf16 %v623, %v622
        %v639 = vpack.c.bf16 %v625, %v624
        %v640 = vpack.c.bf16 %v627, %v626
        %v641 = vpack.c.bf16 %v629, %v628
        %v642 = vpack.c.bf16 %v631, %v630
        %v643 = vpack.c.bf16 %v633, %v632
        %v644 = vpack.c.bf16 %v635, %v634
        %v645 = vpack.c.bf16 %v637, %v636
        %v647 = vsel %vm414, %v638, 0
        %v650 = vsel %vm414, %v639, 0
        %v653 = vsel %vm414, %v640, 0
        %v656 = vsel %vm414, %v641, 0
        %v659 = vsel %vm414, %v642, 0
        %v662 = vsel %vm414, %v643, 0
        %v665 = vsel %vm414, %v644, 0
        %v668 = vsel %vm414, %v645, 0
        %670 = vmatprep.subr.bf16.mxu0 0
        %671 = vmatpush1.bf16.xpose.msra.mxu0 %v647
        %672 = vmatprep.subr.bf16.mxu0 0
        %673 = vmatpush1.bf16.xpose.msra.mxu0 %v650
        %674 = vmatprep.subr.bf16.mxu0 0
        %675 = vmatpush1.bf16.xpose.msra.mxu0 %v653
        %676 = vmatprep.subr.bf16.mxu0 0
        %677 = vmatpush1.bf16.xpose.msra.mxu0 %v656
        %678 = vmatprep.subr.bf16.mxu0 0
        %679 = vmatpush1.bf16.xpose.msra.mxu0 %v659
        %680 = vmatprep.subr.bf16.mxu0 0
        %681 = vmatpush1.bf16.xpose.msra.mxu0 %v662
        %682 = vmatprep.subr.bf16.mxu0 0
        %683 = vmatpush1.bf16.xpose.msra.mxu0 %v665
        %684 = vmatprep.subr.bf16.mxu0 0
        %685 = vmatpush1.bf16.xpose.msra.mxu0 %v668
        %686 = vmatprep.subr.bf16.mxu0 0
        %687 = vmatpush1.bf16.xpose.msra.mxu0 0
        %688 = vmatprep.subr.bf16.mxu0 0
        %689 = vmatpush1.bf16.xpose.msra.mxu0 0
        %690 = vmatprep.subr.bf16.mxu0 0
        %691 = vmatpush1.bf16.xpose.msra.mxu0 0
        %692 = vmatprep.subr.bf16.mxu0 0
        %693 = vmatpush1.bf16.xpose.msra.mxu0 0
        %694 = vmatprep.subr.bf16.mxu0 0
        %695 = vmatpush1.bf16.xpose.msra.mxu0 0
        %696 = vmatprep.subr.bf16.mxu0 0
        %697 = vmatpush1.bf16.xpose.msra.mxu0 0
        %698 = vmatprep.subr.bf16.mxu0 0
        %699 = vmatpush1.bf16.xpose.msra.mxu0 0
        %700 = vmatprep.subr.bf16.mxu0 0
        %701 = vmatpush1.bf16.xpose.msra.mxu0 0
        %702 = vmatprep.mubr.bf16.mxu0 0
        %703 = vmatmul.mubr.bf16.gmra.mrb[0].mxu0 %v416
        %v704 = vpop.f32.mrb[0].mxu0
        %v705 = vadd.f32 %v357, %v704
        %v706 = vpop.f32.mrb[0].mxu0
        %v707 = vpop.f32.mrb[0].mxu0
        %v708 = vadd.f32 %v362, %v707
        %v709 = vpop.f32.mrb[0].mxu0
        %710 = vmatprep.mubr.bf16.mxu0 0
        %711 = vmatmul.mubr.bf16.gmra.mrb[0].mxu0 %v419
        %v712 = vpop.f32.mrb[0].mxu0
        %v713 = vadd.f32 %v367, %v712
        %v714 = vpop.f32.mrb[0].mxu0
        %v715 = vpop.f32.mrb[0].mxu0
        %v716 = vadd.f32 %v372, %v715
        %v717 = vpop.f32.mrb[0].mxu0
        %718 = vmatprep.mubr.bf16.mxu0 0
        %719 = vmatmul.mubr.bf16.gmra.mrb[0].mxu0 %v422
        %v720 = vpop.f32.mrb[0].mxu0
        %v721 = vadd.f32 %v377, %v720
        %v722 = vpop.f32.mrb[0].mxu0
        %v723 = vpop.f32.mrb[0].mxu0
        %v724 = vadd.f32 %v382, %v723
        %v725 = vpop.f32.mrb[0].mxu0
        %726 = vmatprep.mubr.bf16.mxu0 0
        %727 = vmatmul.mubr.bf16.gmra.mrb[0].mxu0 %v425
        %v728 = vpop.f32.mrb[0].mxu0
        %v729 = vadd.f32 %v387, %v728
        %v730 = vpop.f32.mrb[0].mxu0
        %v731 = vpop.f32.mrb[0].mxu0
        %v732 = vadd.f32 %v392, %v731
        %v733 = vpop.f32.mrb[0].mxu0
        %734 = vdwg.mxu0
        %v735 = vmax.f32 %v705, 0.0
        %v736 = vmax.f32 %v708, 0.0
        %v737 = vmax.f32 %v713, 0.0
        %v738 = vmax.f32 %v716, 0.0
        %v739 = vmax.f32 %v721, 0.0
        %v740 = vmax.f32 %v724, 0.0
        %v741 = vmax.f32 %v729, 0.0
        %v742 = vmax.f32 %v732, 0.0
        %v743 = vpack.c.bf16 %v736, %v735
        %v744 = vpack.c.bf16 %v738, %v737
        %v745 = vpack.c.bf16 %v740, %v739
        %v746 = vpack.c.bf16 %v742, %v741
        %747 = vmatprep.subr.bf16.mxu0 0
        %748 = vmatpush1.bf16.msra.mxu0 %v743
        %749 = vmatprep.subr.bf16.mxu0 0
        %750 = vmatpush1.bf16.msra.mxu0 %v744
        %751 = vmatprep.subr.bf16.mxu0 0
        %752 = vmatpush1.bf16.msra.mxu0 %v745
        %753 = vmatprep.subr.bf16.mxu0 0
        %754 = vmatpush1.bf16.msra.mxu0 %v746
        %755 = vmatprep.subr.bf16.mxu0 0
        %756 = vmatpush1.bf16.msra.mxu0 0
        %757 = vmatprep.subr.bf16.mxu0 0
        %758 = vmatpush1.bf16.msra.mxu0 0
        %759 = vmatprep.subr.bf16.mxu0 0
        %760 = vmatpush1.bf16.msra.mxu0 0
        %761 = vmatprep.subr.bf16.mxu0 0
        %762 = vmatpush1.bf16.msra.mxu0 0
        %763 = vmatprep.subr.bf16.mxu0 0
        %764 = vmatpush1.bf16.msra.mxu0 0
        %765 = vmatprep.subr.bf16.mxu0 0
        %766 = vmatpush1.bf16.msra.mxu0 0
        %767 = vmatprep.subr.bf16.mxu0 0
        %768 = vmatpush1.bf16.msra.mxu0 0
        %769 = vmatprep.subr.bf16.mxu0 0
        %770 = vmatpush1.bf16.msra.mxu0 0
        %771 = vmatprep.subr.bf16.mxu0 0
        %772 = vmatpush1.bf16.msra.mxu0 0
        %773 = vmatprep.subr.bf16.mxu0 0
        %774 = vmatpush1.bf16.msra.mxu0 0
        %775 = vmatprep.subr.bf16.mxu0 0
        %776 = vmatpush1.bf16.msra.mxu0 0
        %777 = vmatprep.subr.bf16.mxu0 0
        %778 = vmatpush1.bf16.msra.mxu0 0
        %779 = vmatprep.mubr.bf16.mxu0 0
        %780 = vmatmul.mubr.bf16.gmra.mrb[0].mxu0 %v568
        %v781 = vpop.f32.mrb[0].mxu0
        %v782 = vadd.f32 %v539, %v781
        %v783 = vpop.f32.mrb[0].mxu0
        %v784 = vpop.f32.mrb[0].mxu0
        %v785 = vadd.f32 %v544, %v784
        %v786 = vpop.f32.mrb[0].mxu0
        %787 = vmatprep.mubr.bf16.mxu0 0
        %788 = vmatmul.mubr.bf16.gmra.mrb[0].mxu0 %v571
        %v789 = vpop.f32.mrb[0].mxu0
        %v790 = vadd.f32 %v549, %v789
        %v791 = vpop.f32.mrb[0].mxu0
        %v792 = vpop.f32.mrb[0].mxu0
        %v793 = vadd.f32 %v554, %v792
        %v794 = vpop.f32.mrb[0].mxu0
        %795 = vdwg.mxu0
        %v796 = vsub.f32 %v608, %v782
        %v797 = vsub.f32 %v611, %v785
        %v798 = vsub.f32 %v616, %v790
        %v799 = vsub.f32 %v619, %v793
        %v800 = vmax.f32 %v796, 0.0
        %v801 = vmax.f32 %v797, 0.0
        %v802 = vmax.f32 %v798, 0.0
        %v803 = vmax.f32 %v799, 0.0
        %v804 = vmul.f32 %v800, %v800
        %v805 = vmul.f32 %v801, %v801
        %v806 = vmul.f32 %v802, %v802
        %v807 = vmul.f32 %v803, %v803
        %v808 = vadd.f32 %v804, %v805
        %v809 = vadd.f32 %v808, %v806
        %v810 = vadd.f32 %v809, %v807
        %v811 = vrot.slane %v810, 4
        %v812 = vadd.f32 %v810, %v811
        %v813 = vrot.slane %v812, 2
        %v814 = vadd.f32 %v812, %v813
        %v815 = vrot.slane %v814, 1
        %v816 = vadd.f32 %v814, %v815
        %v817 = vrsqrt.pop %v816
        %v818 = vmul.f32 %v816, %v817
        %vm819 = vcmp.eq.f32.partialorder %v816, inf
        %v820 = vsel %vm819, %v816, %v818
        %vm821 = vcmp.eq.f32.partialorder %v816, 0.0
        %v822 = vand.u32 %v816, 2147483648
        %v823 = vsel %vm821, %v822, %v820
        %824 = vst [vmem:[%s284] sm:$0x1] %v823
        %s825 = sand.u32 %s164, 1
        %s826 = scalar_lea.sflag [#allocation3], %s825
        %s827 = sand.u32 %s164, 1
        %s828 = scalar_lea.vmem [#allocation2], %s827
        // Predicated region
        $region45: #{tpu_custom_call.1} parent=43 // pred_check
          %p829 = pneg %p174
        $region46: #{tpu_custom_call.1} parent=43 // pred_check_branch
          %831 = sbr.rel (%p829) target = $region48
        $region47: #{tpu_custom_call.1} parent=43 // pred_region
          %s833 = ssub.s32 16, 16
          %834 = vsyncadd %s826, %s833
          %s835 = smul.addr %s20, 16
          %s836 = scalar_lea.hbm %s6, %s835
          %s838 = sshll.u32 %s828, 4
          %s839 = int_to_ptr.vmem [resolvable:$true] %s838
          %841 = dma.vmem_to_hbm [thread:$0]  %s839, 16, %s836, %s826
        $region48: #{tpu_custom_call.1} parent=43 // pred_fallthru
          _
      $region44: #{tpu_custom_call.1} parent=5 // pred_fallthru
        _
      %p842 = scmp.le.s32.totalorder 2, %s15
      // Predicated region
      $region49: #{tpu_custom_call.1} parent=5 // pred_check
        %p843 = pneg %p842
      $region50: #{tpu_custom_call.1} parent=5 // pred_check_branch
        %845 = sbr.rel (%p843) target = $region52
      $region51: #{tpu_custom_call.1} parent=5 // pred_region
        %s846 = ssub.s32 %s15, 2
        // Predicated region
        $region53: #{tpu_custom_call.1} parent=51 // pred_check
          %p847 = pneg %p180
        $region54: #{tpu_custom_call.1} parent=51 // pred_check_branch
          %849 = sbr.rel (%p847) target = $region56
        $region55: #{tpu_custom_call.1} parent=51 // pred_region
          %s850 = sand.u32 %s165, 1
          %s851 = scalar_lea.sflag [#allocation3], %s850
          %s852 = sand.u32 %s165, 1
          %s853 = scalar_lea.vmem [#allocation2], %s852
          %854 = dma.done %s851, 16
        $region56: #{tpu_custom_call.1} parent=51 // pred_fallthru
          _
      $region52: #{tpu_custom_call.1} parent=5 // pred_fallthru
        _
    $region6: #{tpu_custom_call.1} parent=1 // loop_footer
      %s19 = sadd.s32 1, %s15
    $region7: #{tpu_custom_call.1} parent=1 // loop_footer_branch
      %14 = sbr.rel target = $region3
    $region8: #{tpu_custom_call.1} parent=1 // loop_exit
      _
    %855 = vsyncpa [#allocation3], 1
    %s856 = scalar_lea.sflag [#allocation3], 1
    %857 = vsyncpa %s856, 1

</llo_original>
